<compile_context>
chip_gen: v6e
topology: v6e:2x2x1
jax: 0.10.0
libtpu: 0.0.40
codegen_flags: <defaults>
</compile_context>

<pallas_src>
import functools

import jax
import jax.numpy as jnp
from jax import lax
from jax.experimental import pallas as pl
from jax.experimental.pallas import tpu as pltpu


def _round_up(v: int, m: int) -> int:
    return (v + m - 1) // m * m


def _causal_conv1d_kernel(*refs, kernel_size, dilation, pad, tile_l, halo_w,
                          has_halo, fuse_taps, compute_dtype):
    if has_halo:
        xh_ref, xc_ref, w_ref, b_ref, o_ref = refs
    else:
        xc_ref, w_ref, b_ref, o_ref = refs

    curr = xc_ref[0]                                        # (C_in_p, tile_l)
    if compute_dtype is not None and curr.dtype != compute_dtype:
        curr = curr.astype(compute_dtype)                   # in-VMEM cast, no HBM pass

    if pad > 0:
        if has_halo:
            # Causal halo = last `pad` samples of the previous time tile; the halo
            # BlockSpec is only halo_w lanes wide, so x is re-read only ~halo_w/tile_l.
            t = pl.program_id(2)
            halo = xh_ref[0, :, halo_w - pad:]              # (C_in_p, pad)
            if compute_dtype is not None and halo.dtype != compute_dtype:
                halo = halo.astype(compute_dtype)
            halo = jnp.where(t > 0, halo, jnp.zeros_like(halo))
        else:
            # Single time tile (incl. pad >= length): zero left-pad in-kernel.
            halo = jnp.zeros((curr.shape[0], pad), dtype=curr.dtype)
        window = jnp.concatenate([halo, curr], axis=-1)     # (C_in_p, pad + tile_l)
    else:
        window = curr

    if fuse_taps:
        # Small C_in: fuse the K taps into one (cout, K*C_in) x (K*C_in, tile_l) matmul
        # for better systolic-array depth utilization.
        cols = [window[:, j * dilation:j * dilation + tile_l]
                for j in range(kernel_size)]
        im2col = cols[0] if kernel_size == 1 else jnp.concatenate(cols, axis=0)
        acc = jnp.dot(w_ref[...], im2col, preferred_element_type=jnp.float32)
    else:
        # Large C_in already saturates the MXU contraction depth: skip the K-fold
        # im2col copy and accumulate per-tap matmuls in f32.
        acc = jnp.zeros((o_ref.shape[1], tile_l), jnp.float32)
        for j in range(kernel_size):
            acc = acc + jnp.dot(w_ref[j],
                                window[:, j * dilation:j * dilation + tile_l],
                                preferred_element_type=jnp.float32)

    o_ref[0] = (acc + b_ref[...]).astype(o_ref.dtype)


def causal_conv1d(x, weight, bias, *, kernel_size, dilation=1,
                  tile_l=None, cout_tile=None, compute_dtype=None, fuse_taps=None):
    """x: (N, C_in, L), weight: (C_out, C_in, K), bias: (C_out,) -> (N, C_out, L).

    compute_dtype: optional dtype (e.g. jnp.bfloat16) for the matmul operands;
    accumulation stays f32, output keeps x.dtype (activation is quantized to bf16
    inside the kernel only, one tile at a time).
    """
    n, c_in, length = x.shape
    c_out, c_in_w, k_w = weight.shape
    assert k_w == kernel_size
    # TODO(synk): grouped conv (groups > 1) not implemented; groups == 1 only.
    assert c_in_w == c_in, "groups != 1 is not supported"
    pad = (kernel_size - 1) * dilation

    # --- channel padding to a sublane multiple (one-time; makes concat/MXU feed
    #     layout-trivial; only done when C_in is misaligned, tiny in that case) --------
    sub = {4: 8, 2: 16, 1: 32}.get(x.dtype.itemsize, 8)
    c_in_p = _round_up(c_in, sub)
    x_p = x if c_in_p == c_in else jnp.pad(x, ((0, 0), (0, c_in_p - c_in), (0, 0)))
    w_p = weight if c_in_p == c_in else jnp.pad(weight,
                                                ((0, 0), (0, c_in_p - c_in), (0, 0)))

    if fuse_taps is None:
        fuse_taps = c_in_p < 256          # large C_in already fills the MXU depth

    # --- time tiling -------------------------------------------------------------
    halo_w = _round_up(pad, 128) if pad > 0 else 0
    if tile_l is None:
        tile_l = 512
    tile_l = _round_up(tile_l, 128)       # lane-dense stores on all full tiles
    if halo_w:
        tile_l = _round_up(tile_l, halo_w)    # halo index_map needs tile_l % halo_w == 0
    if tile_l >= length:
        tile_l = length                   # single tile; halo replaced by in-kernel zeros
        multi = False
    else:
        multi = True
    has_halo = multi and pad > 0

    if cout_tile is None:
        cout_tile = c_out if c_out <= 256 else 256
    cout_tile = min(cout_tile, c_out)
    if cout_tile != c_out:
        cout_tile = _round_up(cout_tile, 8)

    # --- VMEM budget: shrink tiles to fit, set an explicit vmem limit -------------
    xb = x.dtype.itemsize
    wb = (jnp.dtype(compute_dtype).itemsize if compute_dtype is not None
          else weight.dtype.itemsize)
    cb = jnp.dtype(compute_dtype).itemsize if compute_dtype is not None else xb

    def _working_set(tl, ct):
        ws = 2 * c_in_p * tl * xb                         # current x tile (dbl-buffered)
        if has_halo:
            ws += 2 * c_in_p * halo_w * xb                # halo tile
        ws += 2 * kernel_size * ct * c_in_p * wb          # weight block
        ws += 2 * ct * tl * xb                            # output tile
        ws += ct * tl * 4                                 # f32 accumulator
        ws += (kernel_size if fuse_taps else 1) * c_in_p * (tl + pad) * cb  # window/im2col
        ws += 2 * ct * 4                                  # bias
        return ws

    budget = 24 << 20                 # fits every generation's scoped VMEM with headroom
    step = max(128, halo_w)
    for _ in range(16):
        if _working_set(tile_l, cout_tile) <= budget:
            break
        if multi and tile_l > step:
            tile_l = max(step, _round_up(tile_l // 2, step))
        elif cout_tile > 16:
            cout_tile = max(16, _round_up(cout_tile // 2, 8))
        else:
            break
    vmem_limit = int(min(max(_working_set(tile_l, cout_tile) * 3 // 2, 32 << 20),
                         64 << 20))   # <= v7x 64 MiB physical; raises v5e 16 MiB default

    t_tiles = pl.cdiv(length, tile_l)
    co_tiles = pl.cdiv(c_out, cout_tile)

    # --- weights / bias layout -----------------------------------------------------
    if fuse_taps:
        # (C_out, K*C_in_p), tap-major / channel-minor to match the im2col row order.
        w2 = jnp.transpose(w_p, (0, 2, 1)).reshape(c_out, kernel_size * c_in_p)
        w_spec = pl.BlockSpec((cout_tile, kernel_size * c_in_p),
                              lambda co, b, t: (co, 0))
    else:
        # (K, C_out, C_in_p): contiguous per-tap slabs, indexed w_ref[j] in the kernel.
        w2 = jnp.transpose(w_p, (2, 0, 1))
        w_spec = pl.BlockSpec((kernel_size, cout_tile, c_in_p),
                              lambda co, b, t: (0, co, 0))
    if compute_dtype is not None and compute_dtype != w2.dtype:
        w2 = w2.astype(compute_dtype)    # tiny; x is cast per-tile inside the kernel
    b2 = bias.reshape(c_out, 1).astype(jnp.float32)

    kernel = functools.partial(
        _causal_conv1d_kernel,
        kernel_size=kernel_size, dilation=dilation, pad=pad, tile_l=tile_l,
        halo_w=halo_w, has_halo=has_halo, fuse_taps=fuse_taps,
        compute_dtype=compute_dtype,
    )

    in_specs = []
    args = []
    if has_halo:
        r = tile_l // halo_w
        # Narrow halo slab = tail of time tile t-1 (clamped to 0 for the first tile;
        # the kernel zeroes it there).
        in_specs.append(pl.BlockSpec(
            (1, c_in_p, halo_w),
            lambda co, b, t, r=r: (b, 0, jnp.maximum(t * r - 1, 0))))
        args.append(x_p)
    in_specs.append(pl.BlockSpec((1, c_in_p, tile_l), lambda co, b, t: (b, 0, t)))
    args.append(x_p)
    in_specs.append(w_spec)
    args.append(w2)
    in_specs.append(pl.BlockSpec((cout_tile, 1), lambda co, b, t: (co, 0)))
    args.append(b2)

    return pl.pallas_call(
        kernel,
        out_shape=jax.ShapeDtypeStruct((n, c_out, length), x.dtype),
        grid_spec=pltpu.PrefetchScalarGridSpec(
            num_scalar_prefetch=0,
            # co outermost -> weight block fetched only co_tiles times.  Every output
            # block is written exactly once, so all axes are "parallel" (keeps both
            # v7x TensorCores busy even for N = 1, single C_out tile).
            grid=(co_tiles, n, t_tiles),
            in_specs=in_specs,
            out_specs=pl.BlockSpec((1, cout_tile, tile_l),
                                   lambda co, b, t: (b, co, t)),
        ),
        compiler_params=pltpu.CompilerParams(
            dimension_semantics=("parallel", "parallel", "parallel"),
            vmem_limit_bytes=vmem_limit,
        ),
    )(*args)


def _reference(x, weight, bias, *, kernel_size, dilation):
    """Pure-JAX reference matching the PyTorch module exactly (pad == 0 safe)."""
    length = x.shape[-1]
    pad = (kernel_size - 1) * dilation
    y = lax.conv_general_dilated(
        x, weight,
        window_strides=(1,),
        padding=[(pad, pad)],
        rhs_dilation=(dilation,),
        dimension_numbers=("NCH", "OIH", "NCH"),
    )
    y = y + bias.reshape(1, -1, 1)
    return y[:, :, :length]   # crop trailing pad (== [:, :, :-pad], pad-safe)


if __name__ == "__main__":
    key = jax.random.PRNGKey(0)
    k_case1, k_case2 = jax.random.split(key)

    # --- Case 1: module-like small shapes (single time tile), f32 exact check -----
    N, C_IN, C_OUT, K, DIL, L = 2, 4, 8, 3, 2, 16
    kx, kw, kb = jax.random.split(k_case1, 3)
    x = jax.random.normal(kx, (N, C_IN, L), dtype=jnp.float32)
    w = jax.random.normal(kw, (C_OUT, C_IN, K), dtype=jnp.float32) * 0.1
    b = jax.random.normal(kb, (C_OUT,), dtype=jnp.float32) * 0.1

    out = jax.block_until_ready(causal_conv1d(x, w, b, kernel_size=K, dilation=DIL))
    ref = _reference(x, w, b, kernel_size=K, dilation=DIL)
    assert out.shape == (N, C_OUT, L), out.shape
    assert jnp.allclose(out, ref, atol=1e-5, rtol=1e-5), float(jnp.max(jnp.abs(out - ref)))

    # --- Case 2: multiple time tiles + partial last tile (exercises halo path) ----
    N2, C_IN2, C_OUT2, K2, DIL2, L2 = 1, 8, 16, 5, 3, 300
    kx2, kw2, kb2 = jax.random.split(k_case2, 3)
    x2 = jax.random.normal(kx2, (N2, C_IN2, L2), dtype=jnp.float32)
    w2 = jax.random.normal(kw2, (C_OUT2, C_IN2, K2), dtype=jnp.float32) * 0.1
    b2 = jax.random.normal(kb2, (C_OUT2,), dtype=jnp.float32) * 0.1
    out2 = jax.block_until_ready(
        causal_conv1d(x2, w2, b2, kernel_size=K2, dilation=DIL2, tile_l=128))
    ref2 = _reference(x2, w2, b2, kernel_size=K2, dilation=DIL2)
    assert out2.shape == (N2, C_OUT2, L2), out2.shape
    assert jnp.allclose(out2, ref2, atol=1e-4, rtol=1e-4), float(jnp.max(jnp.abs(out2 - ref2)))

    # --- Case 3: bf16 compute path (in-kernel x cast, f32 accumulation) -----------
    out3 = jax.block_until_ready(
        causal_conv1d(x, w, b, kernel_size=K, dilation=DIL, compute_dtype=jnp.bfloat16))
    assert jnp.allclose(out3, ref, atol=5e-2, rtol=5e-2), float(jnp.max(jnp.abs(out3 - ref)))

    # --- Case 4: per-tap (no-im2col) branch forced, with halo ---------------------
    out4 = jax.block_until_ready(
        causal_conv1d(x2, w2, b2, kernel_size=K2, dilation=DIL2, tile_l=128,
                      fuse_taps=False))
    assert jnp.allclose(out4, ref2, atol=1e-4, rtol=1e-4), float(jnp.max(jnp.abs(out4 - ref2)))

    # --- Case 5: short sequence with pad >= length (previously crashed) -----------
    K5, DIL5 = 4, 8                       # pad = 24 > L = 16
    w5 = jax.random.normal(kw, (C_OUT, C_IN, K5), dtype=jnp.float32) * 0.1
    out5 = jax.block_until_ready(causal_conv1d(x, w5, b, kernel_size=K5, dilation=DIL5))
    ref5 = _reference(x, w5, b, kernel_size=K5, dilation=DIL5)
    assert jnp.allclose(out5, ref5, atol=1e-5, rtol=1e-5), float(jnp.max(jnp.abs(out5 - ref5)))

    print("KERNEL_OK")
</pallas_src>

<mosaic_0001>
module attributes {stable_mosaic.version = 11 : i64} {
  func.func @_causal_conv1d_kernel(%arg0: i32, %arg1: i32, %arg2: i32, %arg3: memref<1x8x16xf32, #tpu.memory_space<vmem>>, %arg4: memref<8x24xf32, #tpu.memory_space<vmem>>, %arg5: memref<8x1xf32, #tpu.memory_space<vmem>>, %arg6: memref<1x8x16xf32, #tpu.memory_space<vmem>>) attributes {dimension_semantics = [#tpu.dimension_semantics<parallel>, #tpu.dimension_semantics<parallel>, #tpu.dimension_semantics<parallel>], iteration_bounds = array<i64: 1, 2, 1>, scalar_prefetch = 0 : i64, scratch_operands = 0 : i64, tpu.core_type = #tpu.core_type<tc>, window_params = [{transform_indices = @transform_0, window_bounds = array<i64: 1, 8, 16>}, {transform_indices = @transform_1, window_bounds = array<i64: 8, 24>}, {transform_indices = @transform_2, window_bounds = array<i64: 8, 1>}, {transform_indices = @transform_3, window_bounds = array<i64: 1, 8, 16>}]} {
    %c0 = arith.constant 0 : index
    %c0_0 = arith.constant 0 : index
    %c0_1 = arith.constant 0 : index
    %0 = vector.load %arg3[%c0, %c0_0, %c0_1] : memref<1x8x16xf32, #tpu.memory_space<vmem>>, vector<1x8x16xf32>
    %1 = vector.shape_cast %0 : vector<1x8x16xf32> to vector<8x16xf32>
    %cst = arith.constant 0.000000e+00 : f32
    %2 = vector.broadcast %cst : f32 to vector<8x4xf32>
    %3 = tpu.concatenate %2, %1 in 1 : vector<8x4xf32>, vector<8x16xf32> -> vector<8x20xf32>
    %4 = vector.extract_strided_slice %3 {offsets = [0, 0], sizes = [8, 16], strides = [1, 1]} : vector<8x20xf32> to vector<8x16xf32>
    %5 = vector.extract_strided_slice %3 {offsets = [0, 2], sizes = [8, 16], strides = [1, 1]} : vector<8x20xf32> to vector<8x16xf32>
    %6 = vector.extract_strided_slice %3 {offsets = [0, 4], sizes = [8, 16], strides = [1, 1]} : vector<8x20xf32> to vector<8x16xf32>
    %7 = tpu.concatenate %4, %5, %6 in 0 : vector<8x16xf32>, vector<8x16xf32>, vector<8x16xf32> -> vector<24x16xf32>
    %c0_2 = arith.constant 0 : index
    %c0_3 = arith.constant 0 : index
    %8 = vector.load %arg4[%c0_2, %c0_3] : memref<8x24xf32, #tpu.memory_space<vmem>>, vector<8x24xf32>
    %cst_4 = arith.constant dense<0.000000e+00> : vector<8x16xf32>
    %9 = tpu.matmul %8, %7, %cst_4 {dimension_numbers = #tpu.dot_dimension_numbers<[1], [0], [0], [1], [0, 0, 1, 1], [], []>} : vector<8x24xf32>, vector<24x16xf32>, vector<8x16xf32> -> vector<8x16xf32>
    %c0_5 = arith.constant 0 : index
    %c0_6 = arith.constant 0 : index
    %10 = vector.load %arg5[%c0_5, %c0_6] : memref<8x1xf32, #tpu.memory_space<vmem>>, vector<8x1xf32>
    %11 = vector.broadcast %10 : vector<8x1xf32> to vector<8x16xf32>
    %12 = arith.addf %9, %11 : vector<8x16xf32>
    %c0_7 = arith.constant 0 : index
    %c0_8 = arith.constant 0 : index
    %c0_9 = arith.constant 0 : index
    %13 = vector.load %arg6[%c0_7, %c0_8, %c0_9] : memref<1x8x16xf32, #tpu.memory_space<vmem>>, vector<1x8x16xf32>
    %14 = vector.shape_cast %13 : vector<1x8x16xf32> to vector<8x16xf32>
    %15 = vector.shape_cast %12 : vector<8x16xf32> to vector<1x8x16xf32>
    tpu.vector_store %arg6[%c0_7, %c0_8, %c0_9], %15 {strides = array<i32>} : memref<1x8x16xf32, #tpu.memory_space<vmem>>, vector<1x8x16xf32>,
    return
  }
  func.func @transform_0(%arg0: i32, %arg1: i32, %arg2: i32) -> (i32, i32, i32) {
    %c0_i32 = arith.constant 0 : i32
    %c0_i32_0 = arith.constant 0 : i32
    return %arg1, %c0_i32, %arg2 : i32, i32, i32
  }
  func.func @transform_1(%arg0: i32, %arg1: i32, %arg2: i32) -> (i32, i32) {
    %c0_i32 = arith.constant 0 : i32
    %c0_i32_0 = arith.constant 0 : i32
    return %arg0, %c0_i32 : i32, i32
  }
  func.func @transform_2(%arg0: i32, %arg1: i32, %arg2: i32) -> (i32, i32) {
    %c0_i32 = arith.constant 0 : i32
    %c0_i32_0 = arith.constant 0 : i32
    return %arg0, %c0_i32 : i32, i32
  }
  func.func @transform_3(%arg0: i32, %arg1: i32, %arg2: i32) -> (i32, i32, i32) {
    %c0_i32 = arith.constant 0 : i32
    return %arg1, %arg0, %arg2 : i32, i32, i32
  }
}

</mosaic_0001>

<llo_original>
// kernel: tpu_custom_call.1
$region0: #{tpu_custom_call.1}
  #allocation0 [shape = 'u32[]', space=smem, size = 0x4, offset = 0x4, fixed_abs, tag = 'smem constant byte address 0x4 - core index']
  #allocation1 [shape = 'u32[144,128]{1,0:T(1,128)}', space=vmem, size = 0x12000, scoped, tag = 'internal scratch']
  %s0 = inlined_call_operand.hbm [shape: f32[2,8,16], index: 0, kind: input, shape index: {}]
  %s1 = inlined_call_operand.vmem [shape: f32[8,24], index: 1, kind: input, shape index: {}]
  %s2 = inlined_call_operand.vmem [shape: f32[8,1], index: 2, kind: input, shape index: {}]
  %s3 = inlined_call_operand.hbm [shape: f32[2,8,16], index: 3, kind: output, shape index: {}]
  %s4 = sld [smem:[#allocation0]]
  $region49: #{tpu_custom_call.1} parent=0
    _
  %s6 = ssub.s32 1, %s4
  %s7 = scalar_select 0, %s6, %s4
  $region1: #{tpu_custom_call.1} parent=0
    #allocation2 [shape = 'u8[8192]{0}', space=vmem, size = 0x2000, scoped, tag = 'input window, operand 0']
    #allocation3 [shape = 's32[2]{0}', space=sflag, size = 0x8, scoped, tag = 'scoped memory for tpu_custom_call.1']
    #allocation4 [shape = 's32[2]{0}', space=sflag, size = 0x8, scoped, tag = 'scoped memory for tpu_custom_call.1']
    #allocation5 [shape = 'u8[8192]{0}', space=vmem, size = 0x2000, scoped, tag = 'output window, operand 0']
    %8 = vsyncpa [#allocation3], 0
    %s9 = scalar_lea.sflag [#allocation3], 1
    %10 = vsyncpa %s9, 0
    %11 = vsyncpa [#allocation4], 0
    %s12 = scalar_lea.sflag [#allocation4], 1
    %13 = vsyncpa %s12, 0
    loop: start=0, step=1, limit=4
    $region2: #{tpu_custom_call.1} parent=1 // loop_pre_header
      _
    $region3: #{tpu_custom_call.1} parent=1 // loop_header
      %s15 = sphi 0, %s19
      %p16 = scmp.ge.s32.totalorder %s15, 4
      %s22 = sphi 0, %s41
      %s23 = sphi 0, %s37
      %s24 = sphi 0, %s33
      %s25 = sphi 0, %s22
      %s26 = sphi 0, %s23
      %s27 = sphi 0, %s24
      %s28 = sphi 0, %s25
      %s29 = sphi 0, %s26
      %s30 = sphi 0, %s27
      %s46 = sphi 0, %s48
      %s49 = sphi 0, %s46
      %s50 = sphi 0, %s49
      %s66 = sphi 0, %s50
      %s72 = sphi 0, %s74
      %s75 = sphi 0, %s72
      %s76 = sphi 0, %s75
      %s92 = sphi 0, %s76
      %s98 = sphi 0, %s100
      %s101 = sphi 0, %s98
      %s102 = sphi 0, %s101
      %s118 = sphi 0, %s102
      %s128 = sphi 0, %s130
      %s131 = sphi 0, %s128
      %s132 = sphi 0, %s131
      %s148 = sphi 0, %s132
    $region4: #{tpu_custom_call.1} parent=1 // loop_header_branch
      %18 = sbr.rel (%p16) target = $region8
    $region5: #{tpu_custom_call.1} parent=1 // loop_body
      %s20 = ssub.s32 %s15, 1
      %s21 = ssub.s32 %s15, 2
      %s31 = sadd.s32 1, %s24
      %p32 = scmp.ge.s32.totalorder %s31, 1
      %s33 = scalar_select %p32, 0, %s31
      %s34 = sadd.s32 1, %s23
      %s35 = scalar_select %p32, %s34, %s23
      %p36 = scmp.ge.s32.totalorder %s35, 2
      %s37 = scalar_select %p36, 0, %s35
      %s38 = sadd.s32 1, %s22
      %s39 = scalar_select %p36, %s38, %s22
      %p40 = scmp.ge.s32.totalorder %s39, 1
      %s41 = scalar_select %p40, 0, %s39
      %s42 = ssub.s32 %s23, %s37
      %s43 = ssub.s32 %s24, %s33
      %s44 = sor.u32 %s42, %s43
      %p45 = scmp.eq.s32.totalorder %s44, 0
      %s47 = sadd.s32 %s46, 1
      %s48 = scalar_select %p45, %s46, %s47
      %p51 = pneg %p45
      %p52 = scmp.eq.s32.totalorder %s15, 1
      %p53 = por %p51, %p52
      %p54 = scmp.ne.s32.totalorder %s46, %s49
      %p55 = scmp.eq.s32.totalorder %s15, 0
      %p56 = por %p54, %p55
      %p57 = scmp.ne.s32.totalorder %s46, %s49
      %p58 = scmp.eq.s32.totalorder %s20, 1
      %p59 = por %p57, %p58
      %p60 = scmp.ne.s32.totalorder %s49, %s50
      %p61 = scmp.eq.s32.totalorder %s20, 0
      %p62 = por %p60, %p61
      %p63 = scmp.ne.s32.totalorder %s49, %s50
      %p64 = scmp.eq.s32.totalorder %s21, 1
      %p65 = por %p63, %p64
      %p67 = scmp.ne.s32.totalorder %s50, %s66
      %p68 = scmp.eq.s32.totalorder %s21, 0
      %p69 = por %p67, %p68
      %s70 = ssub.s32 %s22, %s41
      %p71 = scmp.eq.s32.totalorder %s70, 0
      %s73 = sadd.s32 %s72, 1
      %s74 = scalar_select %p71, %s72, %s73
      %p77 = pneg %p71
      %p78 = scmp.eq.s32.totalorder %s15, 1
      %p79 = por %p77, %p78
      %p80 = scmp.ne.s32.totalorder %s72, %s75
      %p81 = scmp.eq.s32.totalorder %s15, 0
      %p82 = por %p80, %p81
      %p83 = scmp.ne.s32.totalorder %s72, %s75
      %p84 = scmp.eq.s32.totalorder %s20, 1
      %p85 = por %p83, %p84
      %p86 = scmp.ne.s32.totalorder %s75, %s76
      %p87 = scmp.eq.s32.totalorder %s20, 0
      %p88 = por %p86, %p87
      %p89 = scmp.ne.s32.totalorder %s75, %s76
      %p90 = scmp.eq.s32.totalorder %s21, 1
      %p91 = por %p89, %p90
      %p93 = scmp.ne.s32.totalorder %s76, %s92
      %p94 = scmp.eq.s32.totalorder %s21, 0
      %p95 = por %p93, %p94
      %s96 = ssub.s32 %s22, %s41
      %p97 = scmp.eq.s32.totalorder %s96, 0
      %s99 = sadd.s32 %s98, 1
      %s100 = scalar_select %p97, %s98, %s99
      %p103 = pneg %p97
      %p104 = scmp.eq.s32.totalorder %s15, 1
      %p105 = por %p103, %p104
      %p106 = scmp.ne.s32.totalorder %s98, %s101
      %p107 = scmp.eq.s32.totalorder %s15, 0
      %p108 = por %p106, %p107
      %p109 = scmp.ne.s32.totalorder %s98, %s101
      %p110 = scmp.eq.s32.totalorder %s20, 1
      %p111 = por %p109, %p110
      %p112 = scmp.ne.s32.totalorder %s101, %s102
      %p113 = scmp.eq.s32.totalorder %s20, 0
      %p114 = por %p112, %p113
      %p115 = scmp.ne.s32.totalorder %s101, %s102
      %p116 = scmp.eq.s32.totalorder %s21, 1
      %p117 = por %p115, %p116
      %p119 = scmp.ne.s32.totalorder %s102, %s118
      %p120 = scmp.eq.s32.totalorder %s21, 0
      %p121 = por %p119, %p120
      %s122 = ssub.s32 %s23, %s37
      %s123 = ssub.s32 %s22, %s41
      %s124 = sor.u32 %s122, %s123
      %s125 = ssub.s32 %s24, %s33
      %s126 = sor.u32 %s124, %s125
      %p127 = scmp.eq.s32.totalorder %s126, 0
      %s129 = sadd.s32 %s128, 1
      %s130 = scalar_select %p127, %s128, %s129
      %p133 = pneg %p127
      %p134 = scmp.eq.s32.totalorder %s15, 1
      %p135 = por %p133, %p134
      %p136 = scmp.ne.s32.totalorder %s128, %s131
      %p137 = scmp.eq.s32.totalorder %s15, 0
      %p138 = por %p136, %p137
      %p139 = scmp.ne.s32.totalorder %s128, %s131
      %p140 = scmp.eq.s32.totalorder %s20, 1
      %p141 = por %p139, %p140
      %p142 = scmp.ne.s32.totalorder %s131, %s132
      %p143 = scmp.eq.s32.totalorder %s20, 0
      %p144 = por %p142, %p143
      %p145 = scmp.ne.s32.totalorder %s131, %s132
      %p146 = scmp.eq.s32.totalorder %s21, 1
      %p147 = por %p145, %p146
      %p149 = scmp.ne.s32.totalorder %s132, %s148
      %p150 = scmp.eq.s32.totalorder %s21, 0
      %p151 = por %p149, %p150
      %p152 = scmp.le.s32.totalorder 1, %s15
      %p153 = scmp.lt.s32.totalorder %s15, 3
      %p154 = pnand %p152, %p153
      %p155 = pneg %p154
      // Predicated region
      $region9: #{tpu_custom_call.1} parent=5 // pred_check
        _
      $region10: #{tpu_custom_call.1} parent=5 // pred_check_branch
        %157 = sbr.rel (%p154) target = $region12
      $region11: #{tpu_custom_call.1} parent=5 // pred_region
        %s158 = ssub.s32 %s15, 1
        // Predicated region
        $region13: #{tpu_custom_call.1} parent=11 // pred_check
          %p159 = pneg %p88
        $region14: #{tpu_custom_call.1} parent=11 // pred_check_branch
          %161 = sbr.rel (%p159) target = $region16
        $region15: #{tpu_custom_call.1} parent=11 // pred_region
          %p162 = scmp.lt.s32.totalorder %s25, 0
          %s163 = scalar_select %p162, %s25, 0
          %s164 = smul.addr %s163, 8
          %s165 = scalar_lea.vmem %s1, %s164
        $region16: #{tpu_custom_call.1} parent=11 // pred_fallthru
          _
        // Predicated region
        $region17: #{tpu_custom_call.1} parent=11 // pred_check
          %p166 = pneg %p114
        $region18: #{tpu_custom_call.1} parent=11 // pred_check_branch
          %168 = sbr.rel (%p166) target = $region20
        $region19: #{tpu_custom_call.1} parent=11 // pred_region
          %p169 = scmp.lt.s32.totalorder %s25, 0
          %s170 = scalar_select %p169, %s25, 0
          %s171 = smul.addr %s170, 8
          %s172 = scalar_lea.vmem %s2, %s171
        $region20: #{tpu_custom_call.1} parent=11 // pred_fallthru
          _
      $region12: #{tpu_custom_call.1} parent=5 // pred_fallthru
        _
      %p173 = scmp.lt.s32.totalorder %s15, 2
      // Predicated region
      $region21: #{tpu_custom_call.1} parent=5 // pred_check
        %p174 = pneg %p173
      $region22: #{tpu_custom_call.1} parent=5 // pred_check_branch
        %176 = sbr.rel (%p174) target = $region24
      $region23: #{tpu_custom_call.1} parent=5 // pred_region
        // Predicated region
        $region25: #{tpu_custom_call.1} parent=23 // pred_check
          %p177 = pneg %p56
        $region26: #{tpu_custom_call.1} parent=23 // pred_check_branch
          %179 = sbr.rel (%p177) target = $region28
        $region27: #{tpu_custom_call.1} parent=23 // pred_region
          %s180 = sand.u32 %s46, 1
          %s181 = scalar_lea.sflag [#allocation3], %s180
          %s182 = sand.u32 %s46, 1
          %s183 = smul.addr %s182, 8
          %s184 = scalar_lea.vmem [#allocation2], %s183
          %s186 = ssub.s32 128, 128
          %187 = vsyncadd %s181, %s186
          %s188 = sadd.s32 %s24, %s23
          %s189 = smul.addr %s188, 128
          %s190 = scalar_lea.hbm %s0, %s189
          %s192 = sshll.u32 %s184, 4
          %s193 = int_to_ptr.vmem [resolvable:$true] %s192
          %195 = dma.hbm_to_vmem [thread:$0]  %s190, 128, %s193, %s181
        $region28: #{tpu_custom_call.1} parent=23 // pred_fallthru
          _
      $region24: #{tpu_custom_call.1} parent=5 // pred_fallthru
        _
      %p196 = scmp.le.s32.totalorder 1, %s15
      %p197 = scmp.lt.s32.totalorder %s15, 3
      %p198 = pnand %p196, %p197
      %p199 = pneg %p198
      // Predicated region
      $region29: #{tpu_custom_call.1} parent=5 // pred_check
        _
      $region30: #{tpu_custom_call.1} parent=5 // pred_check_branch
        %201 = sbr.rel (%p198) target = $region32
      $region31: #{tpu_custom_call.1} parent=5 // pred_region
        %s202 = ssub.s32 %s15, 1
        %s203 = sand.u32 %s49, 1
        %s204 = scalar_lea.sflag [#allocation3], %s203
        %s205 = sand.u32 %s49, 1
        %s206 = smul.addr %s205, 8
        %s207 = scalar_lea.vmem [#allocation2], %s206
        // Predicated region
        $region33: #{tpu_custom_call.1} parent=31 // pred_check
          %p208 = pneg %p62
        $region34: #{tpu_custom_call.1} parent=31 // pred_check_branch
          %210 = sbr.rel (%p208) target = $region36
        $region35: #{tpu_custom_call.1} parent=31 // pred_region
          %211 = dma.done %s204, 128
        $region36: #{tpu_custom_call.1} parent=31 // pred_fallthru
          _
        %s212 = sand.u32 %s49, 1
        %s213 = scalar_lea.sflag [#allocation3], %s212
        %s214 = sand.u32 %s49, 1
        %s215 = smul.addr %s214, 8
        %s216 = scalar_lea.vmem [#allocation2], %s215
        %p217 = pneg %p62
        %p218 = pneg %p59
        %p219 = scmp.lt.s32.totalorder %s25, 0
        %s220 = scalar_select %p219, %s25, 0
        %s221 = smul.addr %s220, 8
        %s222 = scalar_lea.vmem %s1, %s221
        %p223 = pneg %p88
        %p224 = pneg %p85
        %p225 = scmp.lt.s32.totalorder %s25, 0
        %s226 = scalar_select %p225, %s25, 0
        %s227 = smul.addr %s226, 8
        %s228 = scalar_lea.vmem %s2, %s227
        %p229 = pneg %p114
        %p230 = pneg %p111
        %p231 = pneg %p144
        %p232 = pneg %p141
        %s233 = sand.u32 %s131, 1
        %s234 = scalar_lea.sflag [#allocation4], %s233
        %s235 = sand.u32 %s131, 1
        %s236 = smul.addr %s235, 8
        %s237 = scalar_lea.vmem [#allocation5], %s236
        %p238 = scmp.lt.s32.totalorder %s25, 0
        %s239 = scalar_select %p238, %s25, 0
        %s240 = smul.addr %s239, 8
        %s241 = scalar_lea.vmem %s1, %s240
        %p242 = scmp.lt.s32.totalorder %s25, 0
        %s243 = scalar_select %p242, %s25, 0
        %s244 = smul.addr %s243, 8
        %s245 = scalar_lea.vmem %s2, %s244
        %v246 = vld [vmem:[%s207] sm:$0xff]
        %248 = vrot.lane.b32.xlu0 %v246, 4
        %v249 = vpop.permute.xlu0 %248
        %vm251 = vcmask 31744
        %v252 = vsel %vm251, 0.0, %v249
        %254 = vrot.lane.b32.xlu0 %v252, 126
        %v255 = vpop.permute.xlu0 %254
        %257 = vrot.lane.b32.xlu0 %v252, 124
        %v258 = vpop.permute.xlu0 %257
        %v260 = vld [vmem:[%s241] sm:$0xff]
        %v261 = vld [vmem:[%s245] sm:$0xff]
        %263 = vset.pattern.permute.xlu0 0
        %264 = vperm.xlu0 %263, %v261
        %v265 = vpop.permute.xlu0 %264
        %vm267 = vcmask 195584
        %v269 = vsel %vm267, %v260, 0
        %271 = vmatprep.subr.mxu0 0.0
        %272 = vmatpush1.msra.mxu0 0.0
        %273 = vmatprep.subr.mxu0 0.0
        %274 = vmatpush1.msra.mxu0 0.0
        %275 = vmatprep.subr.mxu0 0.0
        %276 = vmatpush1.msra.mxu0 0.0
        %277 = vmatprep.subr.mxu0 0.0
        %278 = vmatpush1.msra.mxu0 0.0
        %279 = vmatprep.subr.mxu0 0.0
        %280 = vmatpush1.msra.mxu0 0.0
        %281 = vmatprep.subr.mxu0 0.0
        %282 = vmatpush1.msra.mxu0 0.0
        %283 = vmatprep.subr.mxu0 0.0
        %284 = vmatpush1.msra.mxu0 0.0
        %285 = vmatprep.subr.mxu0 0.0
        %286 = vmatpush1.msra.mxu0 0.0
        %287 = vmatprep.subr.mxu0 0.0
        %288 = vmatpush1.msra.mxu0 0.0
        %289 = vmatprep.subr.mxu0 0.0
        %290 = vmatpush1.msra.mxu0 0.0
        %291 = vmatprep.subr.mxu0 0.0
        %292 = vmatpush1.msra.mxu0 0.0
        %293 = vmatprep.subr.mxu0 0.0
        %294 = vmatpush1.msra.mxu0 0.0
        %295 = vmatprep.subr.mxu0 0.0
        %296 = vmatpush1.msra.mxu0 0.0
        %297 = vmatprep.subr.mxu0 0.0
        %298 = vmatpush1.msra.mxu0 %v258
        %299 = vmatprep.subr.mxu0 0.0
        %300 = vmatpush1.msra.mxu0 %v255
        %301 = vmatprep.subr.mxu0 0.0
        %302 = vmatpush1.msra.mxu0 %v252
        %303 = vmatprep.subr.mxu0 0.0
        %304 = vmatpush2.msra.mxu0 0.0
        %305 = vmatprep.subr.mxu0 0.0
        %306 = vmatpush2.msra.mxu0 0.0
        %307 = vmatprep.subr.mxu0 0.0
        %308 = vmatpush2.msra.mxu0 0.0
        %309 = vmatprep.subr.mxu0 0.0
        %310 = vmatpush2.msra.mxu0 0.0
        %311 = vmatprep.subr.mxu0 0.0
        %312 = vmatpush2.msra.mxu0 0.0
        %313 = vmatprep.subr.mxu0 0.0
        %314 = vmatpush2.msra.mxu0 0.0
        %315 = vmatprep.subr.mxu0 0.0
        %316 = vmatpush2.msra.mxu0 0.0
        %317 = vmatprep.subr.mxu0 0.0
        %318 = vmatpush2.msra.mxu0 0.0
        %319 = vmatprep.subr.mxu0 0.0
        %320 = vmatpush2.msra.mxu0 0.0
        %321 = vmatprep.subr.mxu0 0.0
        %322 = vmatpush2.msra.mxu0 0.0
        %323 = vmatprep.subr.mxu0 0.0
        %324 = vmatpush2.msra.mxu0 0.0
        %325 = vmatprep.subr.mxu0 0.0
        %326 = vmatpush2.msra.mxu0 0.0
        %327 = vmatprep.subr.mxu0 0.0
        %328 = vmatpush2.msra.mxu0 0.0
        %329 = vmatprep.subr.mxu0 0.0
        %330 = vmatpush2.msra.mxu0 0.0
        %331 = vmatprep.subr.mxu0 0.0
        %332 = vmatpush2.msra.mxu0 0.0
        %333 = vmatprep.subr.mxu0 0.0
        %334 = vmatpush2.msra.mxu0 0.0
        %335 = vmatprep.mubr.f32.mxu0 0.0
        %336 = vmatmul.mubr.f32.gmra.mxu0 %v269
        %v337 = vpop.f32.mrf.mxu0
        %v338 = vadd.f32 %v265, %v337
        %v339 = vpop.f32.mrf.mxu0
        %340 = vdwg.mxu0
        %vm341 = vcmask 130048
        %342 = vst.msk [vmem:[%s237] sm:$0xff] %vm341, %v338
        %s343 = sand.u32 %s131, 1
        %s344 = scalar_lea.sflag [#allocation4], %s343
        %s345 = sand.u32 %s131, 1
        %s346 = smul.addr %s345, 8
        %s347 = scalar_lea.vmem [#allocation5], %s346
        // Predicated region
        $region37: #{tpu_custom_call.1} parent=31 // pred_check
          %p348 = pneg %p141
        $region38: #{tpu_custom_call.1} parent=31 // pred_check_branch
          %350 = sbr.rel (%p348) target = $region40
        $region39: #{tpu_custom_call.1} parent=31 // pred_region
          %s352 = ssub.s32 128, 128
          %353 = vsyncadd %s344, %s352
          %s354 = sadd.s32 %s27, %s25
          %s355 = sadd.s32 %s354, %s26
          %s356 = smul.addr %s355, 128
          %s357 = scalar_lea.hbm %s3, %s356
          %s359 = sshll.u32 %s347, 4
          %s360 = int_to_ptr.vmem [resolvable:$true] %s359
          %362 = dma.vmem_to_hbm [thread:$0]  %s360, 128, %s357, %s344
        $region40: #{tpu_custom_call.1} parent=31 // pred_fallthru
          _
      $region32: #{tpu_custom_call.1} parent=5 // pred_fallthru
        _
      %p363 = scmp.le.s32.totalorder 2, %s15
      // Predicated region
      $region41: #{tpu_custom_call.1} parent=5 // pred_check
        %p364 = pneg %p363
      $region42: #{tpu_custom_call.1} parent=5 // pred_check_branch
        %366 = sbr.rel (%p364) target = $region44
      $region43: #{tpu_custom_call.1} parent=5 // pred_region
        %s367 = ssub.s32 %s15, 2
        // Predicated region
        $region45: #{tpu_custom_call.1} parent=43 // pred_check
          %p368 = pneg %p147
        $region46: #{tpu_custom_call.1} parent=43 // pred_check_branch
          %370 = sbr.rel (%p368) target = $region48
        $region47: #{tpu_custom_call.1} parent=43 // pred_region
          %s371 = sand.u32 %s132, 1
          %s372 = scalar_lea.sflag [#allocation4], %s371
          %s373 = sand.u32 %s132, 1
          %s374 = smul.addr %s373, 8
          %s375 = scalar_lea.vmem [#allocation5], %s374
          %376 = dma.done %s372, 128
        $region48: #{tpu_custom_call.1} parent=43 // pred_fallthru
          _
      $region44: #{tpu_custom_call.1} parent=5 // pred_fallthru
        _
    $region6: #{tpu_custom_call.1} parent=1 // loop_footer
      %s19 = sadd.s32 1, %s15
    $region7: #{tpu_custom_call.1} parent=1 // loop_footer_branch
      %14 = sbr.rel target = $region3
    $region8: #{tpu_custom_call.1} parent=1 // loop_exit
      _
    %377 = vsyncpa [#allocation3], 1
    %s378 = scalar_lea.sflag [#allocation3], 1
    %379 = vsyncpa %s378, 1
    %380 = vsyncpa [#allocation4], 1
    %s381 = scalar_lea.sflag [#allocation4], 1
    %382 = vsyncpa %s381, 1

</llo_original>
